<compile_context>
chip_gen: v7x
topology: tpu7x:2x2x1
jax: 0.10.0
libtpu: 0.0.40
codegen_flags: <defaults>
</compile_context>

<pallas_src>
import jax
import jax.numpy as jnp
from jax import lax
from jax.experimental import pallas as pl
from jax.experimental.pallas import tpu as pltpu


def _round_up(x, m):
    return (x + m - 1) // m * m


# ---------------------------------------------------------------------------
# Pallas kernel: vocab-space attention pooling + gated MLP, fully fused.
# ---------------------------------------------------------------------------
def tower_kernel(ids_ref,                   # (TB, 2L) int32: [group ids | leaf ids]
                 ealogit_ref,               # (1, Vp)  exp(attention logit), pad rows = 0
                 eg_ref, el_ref,            # (Vp, H)  emb @ wg, emb @ wl
                 bg_ref, bl_ref,            # (1, H)   fc_group / fc_leaf biases
                 ww_t_ref,                  # (1, H)   fc_weight weight (transposed)
                 bw_ref,                    # (1, 1)   fc_weight bias (SMEM scalar)
                 wc_ref, bc_ref,            # (H, Op), (1, Op)  fc_combine (lane-padded)
                 out_ref):                  # (TB, Op)
    TB = ids_ref.shape[0]
    L = ids_ref.shape[1] // 2
    Vp = ealogit_ref.shape[1]

    ids = ids_ref[...]                                         # (TB, 2L) int32
    ealogit = ealogit_ref[...]                                 # (1, Vp)
    iota_v = lax.broadcasted_iota(jnp.int32, (1, Vp), 1)       # (1, Vp)

    def pooled_hidden(col_off, e_ref, b_ref):
        # Token histogram count[b, v] = #{l : ids[b, col_off + l] == v}.
        # NOTE: ids >= Vp (or negative / >= V) hit zero-weight pad slots and are
        # effectively dropped from the softmax, unlike jnp.take's clamping.
        cnt = (ids[:, col_off:col_off + 1] == iota_v).astype(jnp.float32)
        for l in range(1, L):
            cnt = cnt + (ids[:, col_off + l:col_off + l + 1] ==
                         iota_v).astype(jnp.float32)           # (TB, Vp)
        u = cnt * ealogit                                      # softmax numerator
        z = jnp.sum(u, axis=-1, keepdims=True)                 # (TB, 1) softmax denom
        # relu(ctx @ W + b) == relu((U @ (emb @ W)) / z + b): one MXU matmul per tower.
        h = jnp.dot(u, e_ref[...], preferred_element_type=jnp.float32)   # (TB, H)
        return jnp.maximum(h * (1.0 / z) + b_ref[...], 0.0)

    hg = pooled_hidden(0, eg_ref, bg_ref)                      # (TB, H)
    hl = pooled_hidden(L, el_ref, bl_ref)                      # (TB, H)

    # fc_weight (out dim 1): VPU multiply + lane reduce instead of an N=1 matmul.
    gate = jax.nn.sigmoid(
        jnp.sum(hg * ww_t_ref[...], axis=-1, keepdims=True) + bw_ref[0, 0])  # (TB, 1)

    combined = hg + gate * hl                                  # (TB, H)

    out_ref[...] = jnp.maximum(
        jnp.dot(combined, wc_ref[...], preferred_element_type=jnp.float32)
        + bc_ref[...], 0.0)                                    # (TB, Op)


# ---------------------------------------------------------------------------
# Wrapper: parameter folding + pallas_call over a batch-tiled grid.
# ---------------------------------------------------------------------------
def hierarchical_candidate_tower(group_tokens, leaf_tokens, params, *, max_tb=512):
    emb = params["emb"]                                        # (V, D)
    V, D = emb.shape
    H = params["wg"].shape[1]
    O = params["wc"].shape[1]
    B, L = group_tokens.shape

    # Batch tile: big enough to amortize the ~0.35 us/step pipeline overhead, but
    # guarantee >= 2 grid steps so both v7x TensorCores get work ("parallel" axis).
    TB = min(max_tb, max(8, _round_up(pl.cdiv(B, 2), 8)))
    Bp = max(_round_up(B, TB), 2 * TB)
    grid = Bp // TB

    Vp = _round_up(V, 128)                                     # lane-dense vocab axis
    Op = _round_up(O, 128)                                     # lane-dense output

    # One packed id block per step: [group ids | leaf ids].
    ids = jnp.zeros((Bp, 2 * L), jnp.int32)
    ids = ids.at[:B, :L].set(group_tokens.astype(jnp.int32))
    ids = ids.at[:B, L:].set(leaf_tokens.astype(jnp.int32))

    emb_p = jnp.zeros((Vp, D), jnp.float32).at[:V].set(emb)    # row 0 == 0 (padding_idx)

    # Per-vocab attention logits; attn_b cancels in the softmax, subtract the global
    # max for stability; padded vocab slots get weight 0.
    alogit = (emb_p @ params["attn_w"].T)[:, 0]                # (Vp,)
    alogit = alogit - jnp.max(alogit[:V])
    ealogit = jnp.where(jnp.arange(Vp) < V,
                        jnp.exp(alogit), 0.0).reshape(1, Vp)   # (1, Vp)

    # Fold fc_group / fc_leaf into the vocab-space matmul (exact reassociation).
    eg = (emb_p @ params["wg"]).astype(jnp.float32)            # (Vp, H)
    el = (emb_p @ params["wl"]).astype(jnp.float32)            # (Vp, H)

    ww_t = params["ww"].T                                      # (1, H)
    bw = params["bw"].reshape(1, 1)                            # scalar -> SMEM

    wc_p = jnp.zeros((H, Op), jnp.float32).at[:, :O].set(params["wc"])
    bc_p = jnp.zeros((1, Op), jnp.float32).at[:, :O].set(params["bc"])

    out = pl.pallas_call(
        tower_kernel,
        out_shape=jax.ShapeDtypeStruct((Bp, Op), jnp.float32),
        grid_spec=pltpu.PrefetchScalarGridSpec(
            num_scalar_prefetch=0,
            grid=(grid,),
            in_specs=[
                pl.BlockSpec((TB, 2 * L), lambda b: (b, 0)),        # packed token ids
                pl.BlockSpec((1, Vp), lambda b: (0, 0)),            # exp(attn logits)
                pl.BlockSpec((Vp, H), lambda b: (0, 0)),            # emb @ wg
                pl.BlockSpec((Vp, H), lambda b: (0, 0)),            # emb @ wl
                pl.BlockSpec((1, H), lambda b: (0, 0)),             # bg
                pl.BlockSpec((1, H), lambda b: (0, 0)),             # bl
                pl.BlockSpec((1, H), lambda b: (0, 0)),             # fc_weight weight^T
                pl.BlockSpec(memory_space=pltpu.MemorySpace.SMEM),  # fc_weight bias
                pl.BlockSpec((H, Op), lambda b: (0, 0)),            # fc_combine weight
                pl.BlockSpec((1, Op), lambda b: (0, 0)),            # fc_combine bias
            ],
            out_specs=pl.BlockSpec((TB, Op), lambda b: (b, 0)),
        ),
        compiler_params=pltpu.CompilerParams(
            dimension_semantics=("parallel",),
            vmem_limit_bytes=32 * 1024 * 1024),
    )(ids, ealogit, eg, el, params["bg"], params["bl"], ww_t, bw, wc_p, bc_p)

    return out[:B, :O]                                         # [B, out_dim]


# ---------------------------------------------------------------------------
# Pure-JAX reference (mirrors the PyTorch module, incl. the attention bias).
# ---------------------------------------------------------------------------
def reference_forward(group_tokens, leaf_tokens, params):
    emb = params["emb"]

    def attend(x):                                             # x: [B, L, D]
        logits = jnp.einsum("bld,d->bl", x, params["attn_w"][0]) + params["attn_b"][0, 0]
        w = jax.nn.softmax(logits, axis=1)[..., None]          # [B, L, 1]
        return jnp.sum(w * x, axis=1)                          # [B, D]

    g = attend(jnp.take(emb, group_tokens, axis=0))
    l = attend(jnp.take(emb, leaf_tokens, axis=0))
    hg = jax.nn.relu(g @ params["wg"] + params["bg"])
    hl = jax.nn.relu(l @ params["wl"] + params["bl"])
    gate = jax.nn.sigmoid(hg @ params["ww"] + params["bw"])
    combined = hg + gate * hl
    return jax.nn.relu(combined @ params["wc"] + params["bc"])


# ---------------------------------------------------------------------------
# Deterministic parameter init (synthetic; no checkpoint loading).
# ---------------------------------------------------------------------------
def init_params(key, vocab, embed_dim, hidden=128, out_dim=64):
    ks = jax.random.split(key, 10)
    scale = 0.1
    emb = scale * jax.random.normal(ks[0], (vocab, embed_dim), jnp.float32)
    emb = emb.at[0].set(0.0)                                   # padding_idx=0 -> zero row
    return {
        "emb": emb,
        "attn_w": scale * jax.random.normal(ks[1], (1, embed_dim), jnp.float32),
        "attn_b": scale * jax.random.normal(ks[2], (1, 1), jnp.float32),
        "wg": scale * jax.random.normal(ks[3], (embed_dim, hidden), jnp.float32),
        "bg": scale * jax.random.normal(ks[4], (1, hidden), jnp.float32),
        "wl": scale * jax.random.normal(ks[5], (embed_dim, hidden), jnp.float32),
        "bl": scale * jax.random.normal(ks[6], (1, hidden), jnp.float32),
        "ww": scale * jax.random.normal(ks[7], (hidden, 1), jnp.float32),
        "bw": jnp.zeros((1, 1), jnp.float32),
        "wc": scale * jax.random.normal(ks[8], (hidden, out_dim), jnp.float32),
        "bc": scale * jax.random.normal(ks[9], (1, out_dim), jnp.float32),
    }


if __name__ == "__main__":
    B, L, D = 2, 8, 32          # batch, max_len (seq), text_embed_dim
    VOCAB, HIDDEN, OUT = 50, 128, 64

    key = jax.random.PRNGKey(0)
    kp, kg, kl = jax.random.split(key, 3)
    params = init_params(kp, VOCAB, D, HIDDEN, OUT)

    # token ids in [0, VOCAB); zero some entries to exercise the padding row
    group_tokens = jax.random.randint(kg, (B, L), 0, VOCAB, dtype=jnp.int32)
    leaf_tokens = jax.random.randint(kl, (B, L), 0, VOCAB, dtype=jnp.int32)
    group_tokens = group_tokens.at[:, -2:].set(0)
    leaf_tokens = leaf_tokens.at[:, -1:].set(0)

    out = hierarchical_candidate_tower(group_tokens, leaf_tokens, params)
    out = jax.block_until_ready(out)

    ref = reference_forward(group_tokens, leaf_tokens, params)
    assert out.shape == (B, OUT)
    assert jnp.allclose(out, ref, atol=1e-5, rtol=1e-5), (
        f"mismatch: max abs err = {jnp.max(jnp.abs(out - ref))}")

    print("KERNEL_OK")
</pallas_src>

<mosaic_0001>
module attributes {stable_mosaic.version = 11 : i64} {
  func.func @tower_kernel(%arg0: i32, %arg1: memref<8x16xi32, #tpu.memory_space<vmem>>, %arg2: memref<1x128xf32, #tpu.memory_space<vmem>>, %arg3: memref<128x128xf32, #tpu.memory_space<vmem>>, %arg4: memref<128x128xf32, #tpu.memory_space<vmem>>, %arg5: memref<1x128xf32, #tpu.memory_space<vmem>>, %arg6: memref<1x128xf32, #tpu.memory_space<vmem>>, %arg7: memref<1x128xf32, #tpu.memory_space<vmem>>, %arg8: memref<1x1xf32, #tpu.memory_space<smem>>, %arg9: memref<128x128xf32, #tpu.memory_space<vmem>>, %arg10: memref<1x128xf32, #tpu.memory_space<vmem>>, %arg11: memref<8x128xf32, #tpu.memory_space<vmem>>) attributes {dimension_semantics = [#tpu.dimension_semantics<parallel>], iteration_bounds = array<i64: 2>, scalar_prefetch = 0 : i64, scratch_operands = 0 : i64, tpu.core_type = #tpu.core_type<tc>, window_params = [{transform_indices = @transform_0, window_bounds = array<i64: 8, 16>}, {pipeline_mode = #tpu.pipeline_mode<synchronous>, transform_indices = @transform_1, window_bounds = array<i64: 1, 128>}, {pipeline_mode = #tpu.pipeline_mode<synchronous>, transform_indices = @transform_2, window_bounds = array<i64: 128, 128>}, {pipeline_mode = #tpu.pipeline_mode<synchronous>, transform_indices = @transform_3, window_bounds = array<i64: 128, 128>}, {pipeline_mode = #tpu.pipeline_mode<synchronous>, transform_indices = @transform_4, window_bounds = array<i64: 1, 128>}, {pipeline_mode = #tpu.pipeline_mode<synchronous>, transform_indices = @transform_5, window_bounds = array<i64: 1, 128>}, {pipeline_mode = #tpu.pipeline_mode<synchronous>, transform_indices = @transform_6, window_bounds = array<i64: 1, 128>}, {transform_indices = @transform_7, window_bounds = array<i64: 1, 1>}, {pipeline_mode = #tpu.pipeline_mode<synchronous>, transform_indices = @transform_8, window_bounds = array<i64: 128, 128>}, {pipeline_mode = #tpu.pipeline_mode<synchronous>, transform_indices = @transform_9, window_bounds = array<i64: 1, 128>}, {transform_indices = @transform_10, window_bounds = array<i64: 8, 128>}]} {
    %c0 = arith.constant 0 : index
    %c0_0 = arith.constant 0 : index
    %0 = vector.load %arg1[%c0, %c0_0] : memref<8x16xi32, #tpu.memory_space<vmem>>, vector<8x16xi32>
    %c0_1 = arith.constant 0 : index
    %c0_2 = arith.constant 0 : index
    %1 = vector.load %arg2[%c0_1, %c0_2] : memref<1x128xf32, #tpu.memory_space<vmem>>, vector<1x128xf32>
    %2 = tpu.iota {dimensions = array<i32: 1>} : vector<1x128xi32>
    %3 = vector.extract_strided_slice %0 {offsets = [0, 0], sizes = [8, 1], strides = [1, 1]} : vector<8x16xi32> to vector<8x1xi32>
    %4 = vector.broadcast %3 : vector<8x1xi32> to vector<8x128xi32>
    %5 = vector.broadcast %2 : vector<1x128xi32> to vector<8x128xi32>
    %6 = arith.cmpi eq, %4, %5 : vector<8x128xi32>
    %7 = arith.extui %6 : vector<8x128xi1> to vector<8x128xi32>
    %8 = arith.sitofp %7 : vector<8x128xi32> to vector<8x128xf32>
    %9 = vector.extract_strided_slice %0 {offsets = [0, 1], sizes = [8, 1], strides = [1, 1]} : vector<8x16xi32> to vector<8x1xi32>
    %10 = vector.broadcast %9 : vector<8x1xi32> to vector<8x128xi32>
    %11 = vector.broadcast %2 : vector<1x128xi32> to vector<8x128xi32>
    %12 = arith.cmpi eq, %10, %11 : vector<8x128xi32>
    %13 = arith.extui %12 : vector<8x128xi1> to vector<8x128xi32>
    %14 = arith.sitofp %13 : vector<8x128xi32> to vector<8x128xf32>
    %15 = arith.addf %8, %14 : vector<8x128xf32>
    %16 = vector.extract_strided_slice %0 {offsets = [0, 2], sizes = [8, 1], strides = [1, 1]} : vector<8x16xi32> to vector<8x1xi32>
    %17 = vector.broadcast %16 : vector<8x1xi32> to vector<8x128xi32>
    %18 = vector.broadcast %2 : vector<1x128xi32> to vector<8x128xi32>
    %19 = arith.cmpi eq, %17, %18 : vector<8x128xi32>
    %20 = arith.extui %19 : vector<8x128xi1> to vector<8x128xi32>
    %21 = arith.sitofp %20 : vector<8x128xi32> to vector<8x128xf32>
    %22 = arith.addf %15, %21 : vector<8x128xf32>
    %23 = vector.extract_strided_slice %0 {offsets = [0, 3], sizes = [8, 1], strides = [1, 1]} : vector<8x16xi32> to vector<8x1xi32>
    %24 = vector.broadcast %23 : vector<8x1xi32> to vector<8x128xi32>
    %25 = vector.broadcast %2 : vector<1x128xi32> to vector<8x128xi32>
    %26 = arith.cmpi eq, %24, %25 : vector<8x128xi32>
    %27 = arith.extui %26 : vector<8x128xi1> to vector<8x128xi32>
    %28 = arith.sitofp %27 : vector<8x128xi32> to vector<8x128xf32>
    %29 = arith.addf %22, %28 : vector<8x128xf32>
    %30 = vector.extract_strided_slice %0 {offsets = [0, 4], sizes = [8, 1], strides = [1, 1]} : vector<8x16xi32> to vector<8x1xi32>
    %31 = vector.broadcast %30 : vector<8x1xi32> to vector<8x128xi32>
    %32 = vector.broadcast %2 : vector<1x128xi32> to vector<8x128xi32>
    %33 = arith.cmpi eq, %31, %32 : vector<8x128xi32>
    %34 = arith.extui %33 : vector<8x128xi1> to vector<8x128xi32>
    %35 = arith.sitofp %34 : vector<8x128xi32> to vector<8x128xf32>
    %36 = arith.addf %29, %35 : vector<8x128xf32>
    %37 = vector.extract_strided_slice %0 {offsets = [0, 5], sizes = [8, 1], strides = [1, 1]} : vector<8x16xi32> to vector<8x1xi32>
    %38 = vector.broadcast %37 : vector<8x1xi32> to vector<8x128xi32>
    %39 = vector.broadcast %2 : vector<1x128xi32> to vector<8x128xi32>
    %40 = arith.cmpi eq, %38, %39 : vector<8x128xi32>
    %41 = arith.extui %40 : vector<8x128xi1> to vector<8x128xi32>
    %42 = arith.sitofp %41 : vector<8x128xi32> to vector<8x128xf32>
    %43 = arith.addf %36, %42 : vector<8x128xf32>
    %44 = vector.extract_strided_slice %0 {offsets = [0, 6], sizes = [8, 1], strides = [1, 1]} : vector<8x16xi32> to vector<8x1xi32>
    %45 = vector.broadcast %44 : vector<8x1xi32> to vector<8x128xi32>
    %46 = vector.broadcast %2 : vector<1x128xi32> to vector<8x128xi32>
    %47 = arith.cmpi eq, %45, %46 : vector<8x128xi32>
    %48 = arith.extui %47 : vector<8x128xi1> to vector<8x128xi32>
    %49 = arith.sitofp %48 : vector<8x128xi32> to vector<8x128xf32>
    %50 = arith.addf %43, %49 : vector<8x128xf32>
    %51 = vector.extract_strided_slice %0 {offsets = [0, 7], sizes = [8, 1], strides = [1, 1]} : vector<8x16xi32> to vector<8x1xi32>
    %52 = vector.broadcast %51 : vector<8x1xi32> to vector<8x128xi32>
    %53 = vector.broadcast %2 : vector<1x128xi32> to vector<8x128xi32>
    %54 = arith.cmpi eq, %52, %53 : vector<8x128xi32>
    %55 = arith.extui %54 : vector<8x128xi1> to vector<8x128xi32>
    %56 = arith.sitofp %55 : vector<8x128xi32> to vector<8x128xf32>
    %57 = arith.addf %50, %56 : vector<8x128xf32>
    %58 = vector.broadcast %1 : vector<1x128xf32> to vector<8x128xf32>
    %59 = arith.mulf %57, %58 : vector<8x128xf32>
    %cst = arith.constant dense<0.000000e+00> : vector<8xf32>
    %60 = vector.multi_reduction <add>, %59, %cst [1] : vector<8x128xf32> to vector<8xf32>
    %61 = vector.shape_cast %60 : vector<8xf32> to vector<8x1xf32>
    %c0_3 = arith.constant 0 : index
    %c0_4 = arith.constant 0 : index
    %62 = vector.load %arg3[%c0_3, %c0_4] : memref<128x128xf32, #tpu.memory_space<vmem>>, vector<128x128xf32>
    %cst_5 = arith.constant dense<0.000000e+00> : vector<8x128xf32>
    %63 = tpu.matmul %59, %62, %cst_5 {dimension_numbers = #tpu.dot_dimension_numbers<[1], [0], [0], [1], [0, 0, 1, 1], [], []>} : vector<8x128xf32>, vector<128x128xf32>, vector<8x128xf32> -> vector<8x128xf32>
    %cst_6 = arith.constant 1.000000e+00 : f32
    %64 = vector.broadcast %cst_6 : f32 to vector<8x1xf32>
    %65 = arith.divf %64, %61 : vector<8x1xf32>
    %66 = vector.broadcast %65 : vector<8x1xf32> to vector<8x128xf32>
    %67 = arith.mulf %63, %66 : vector<8x128xf32>
    %c0_7 = arith.constant 0 : index
    %c0_8 = arith.constant 0 : index
    %68 = vector.load %arg5[%c0_7, %c0_8] : memref<1x128xf32, #tpu.memory_space<vmem>>, vector<1x128xf32>
    %69 = vector.broadcast %68 : vector<1x128xf32> to vector<8x128xf32>
    %70 = arith.addf %67, %69 : vector<8x128xf32>
    %cst_9 = arith.constant 0.000000e+00 : f32
    %71 = vector.broadcast %cst_9 : f32 to vector<8x128xf32>
    %72 = arith.maximumf %70, %71 : vector<8x128xf32>
    %73 = vector.extract_strided_slice %0 {offsets = [0, 8], sizes = [8, 1], strides = [1, 1]} : vector<8x16xi32> to vector<8x1xi32>
    %74 = vector.broadcast %73 : vector<8x1xi32> to vector<8x128xi32>
    %75 = vector.broadcast %2 : vector<1x128xi32> to vector<8x128xi32>
    %76 = arith.cmpi eq, %74, %75 : vector<8x128xi32>
    %77 = arith.extui %76 : vector<8x128xi1> to vector<8x128xi32>
    %78 = arith.sitofp %77 : vector<8x128xi32> to vector<8x128xf32>
    %79 = vector.extract_strided_slice %0 {offsets = [0, 9], sizes = [8, 1], strides = [1, 1]} : vector<8x16xi32> to vector<8x1xi32>
    %80 = vector.broadcast %79 : vector<8x1xi32> to vector<8x128xi32>
    %81 = vector.broadcast %2 : vector<1x128xi32> to vector<8x128xi32>
    %82 = arith.cmpi eq, %80, %81 : vector<8x128xi32>
    %83 = arith.extui %82 : vector<8x128xi1> to vector<8x128xi32>
    %84 = arith.sitofp %83 : vector<8x128xi32> to vector<8x128xf32>
    %85 = arith.addf %78, %84 : vector<8x128xf32>
    %86 = vector.extract_strided_slice %0 {offsets = [0, 10], sizes = [8, 1], strides = [1, 1]} : vector<8x16xi32> to vector<8x1xi32>
    %87 = vector.broadcast %86 : vector<8x1xi32> to vector<8x128xi32>
    %88 = vector.broadcast %2 : vector<1x128xi32> to vector<8x128xi32>
    %89 = arith.cmpi eq, %87, %88 : vector<8x128xi32>
    %90 = arith.extui %89 : vector<8x128xi1> to vector<8x128xi32>
    %91 = arith.sitofp %90 : vector<8x128xi32> to vector<8x128xf32>
    %92 = arith.addf %85, %91 : vector<8x128xf32>
    %93 = vector.extract_strided_slice %0 {offsets = [0, 11], sizes = [8, 1], strides = [1, 1]} : vector<8x16xi32> to vector<8x1xi32>
    %94 = vector.broadcast %93 : vector<8x1xi32> to vector<8x128xi32>
    %95 = vector.broadcast %2 : vector<1x128xi32> to vector<8x128xi32>
    %96 = arith.cmpi eq, %94, %95 : vector<8x128xi32>
    %97 = arith.extui %96 : vector<8x128xi1> to vector<8x128xi32>
    %98 = arith.sitofp %97 : vector<8x128xi32> to vector<8x128xf32>
    %99 = arith.addf %92, %98 : vector<8x128xf32>
    %100 = vector.extract_strided_slice %0 {offsets = [0, 12], sizes = [8, 1], strides = [1, 1]} : vector<8x16xi32> to vector<8x1xi32>
    %101 = vector.broadcast %100 : vector<8x1xi32> to vector<8x128xi32>
    %102 = vector.broadcast %2 : vector<1x128xi32> to vector<8x128xi32>
    %103 = arith.cmpi eq, %101, %102 : vector<8x128xi32>
    %104 = arith.extui %103 : vector<8x128xi1> to vector<8x128xi32>
    %105 = arith.sitofp %104 : vector<8x128xi32> to vector<8x128xf32>
    %106 = arith.addf %99, %105 : vector<8x128xf32>
    %107 = vector.extract_strided_slice %0 {offsets = [0, 13], sizes = [8, 1], strides = [1, 1]} : vector<8x16xi32> to vector<8x1xi32>
    %108 = vector.broadcast %107 : vector<8x1xi32> to vector<8x128xi32>
    %109 = vector.broadcast %2 : vector<1x128xi32> to vector<8x128xi32>
    %110 = arith.cmpi eq, %108, %109 : vector<8x128xi32>
    %111 = arith.extui %110 : vector<8x128xi1> to vector<8x128xi32>
    %112 = arith.sitofp %111 : vector<8x128xi32> to vector<8x128xf32>
    %113 = arith.addf %106, %112 : vector<8x128xf32>
    %114 = vector.extract_strided_slice %0 {offsets = [0, 14], sizes = [8, 1], strides = [1, 1]} : vector<8x16xi32> to vector<8x1xi32>
    %115 = vector.broadcast %114 : vector<8x1xi32> to vector<8x128xi32>
    %116 = vector.broadcast %2 : vector<1x128xi32> to vector<8x128xi32>
    %117 = arith.cmpi eq, %115, %116 : vector<8x128xi32>
    %118 = arith.extui %117 : vector<8x128xi1> to vector<8x128xi32>
    %119 = arith.sitofp %118 : vector<8x128xi32> to vector<8x128xf32>
    %120 = arith.addf %113, %119 : vector<8x128xf32>
    %121 = vector.extract_strided_slice %0 {offsets = [0, 15], sizes = [8, 1], strides = [1, 1]} : vector<8x16xi32> to vector<8x1xi32>
    %122 = vector.broadcast %121 : vector<8x1xi32> to vector<8x128xi32>
    %123 = vector.broadcast %2 : vector<1x128xi32> to vector<8x128xi32>
    %124 = arith.cmpi eq, %122, %123 : vector<8x128xi32>
    %125 = arith.extui %124 : vector<8x128xi1> to vector<8x128xi32>
    %126 = arith.sitofp %125 : vector<8x128xi32> to vector<8x128xf32>
    %127 = arith.addf %120, %126 : vector<8x128xf32>
    %128 = vector.broadcast %1 : vector<1x128xf32> to vector<8x128xf32>
    %129 = arith.mulf %127, %128 : vector<8x128xf32>
    %cst_10 = arith.constant dense<0.000000e+00> : vector<8xf32>
    %130 = vector.multi_reduction <add>, %129, %cst_10 [1] : vector<8x128xf32> to vector<8xf32>
    %131 = vector.shape_cast %130 : vector<8xf32> to vector<8x1xf32>
    %c0_11 = arith.constant 0 : index
    %c0_12 = arith.constant 0 : index
    %132 = vector.load %arg4[%c0_11, %c0_12] : memref<128x128xf32, #tpu.memory_space<vmem>>, vector<128x128xf32>
    %cst_13 = arith.constant dense<0.000000e+00> : vector<8x128xf32>
    %133 = tpu.matmul %129, %132, %cst_13 {dimension_numbers = #tpu.dot_dimension_numbers<[1], [0], [0], [1], [0, 0, 1, 1], [], []>} : vector<8x128xf32>, vector<128x128xf32>, vector<8x128xf32> -> vector<8x128xf32>
    %cst_14 = arith.constant 1.000000e+00 : f32
    %134 = vector.broadcast %cst_14 : f32 to vector<8x1xf32>
    %135 = arith.divf %134, %131 : vector<8x1xf32>
    %136 = vector.broadcast %135 : vector<8x1xf32> to vector<8x128xf32>
    %137 = arith.mulf %133, %136 : vector<8x128xf32>
    %c0_15 = arith.constant 0 : index
    %c0_16 = arith.constant 0 : index
    %138 = vector.load %arg6[%c0_15, %c0_16] : memref<1x128xf32, #tpu.memory_space<vmem>>, vector<1x128xf32>
    %139 = vector.broadcast %138 : vector<1x128xf32> to vector<8x128xf32>
    %140 = arith.addf %137, %139 : vector<8x128xf32>
    %cst_17 = arith.constant 0.000000e+00 : f32
    %141 = vector.broadcast %cst_17 : f32 to vector<8x128xf32>
    %142 = arith.maximumf %140, %141 : vector<8x128xf32>
    %c0_18 = arith.constant 0 : index
    %c0_19 = arith.constant 0 : index
    %143 = vector.load %arg7[%c0_18, %c0_19] : memref<1x128xf32, #tpu.memory_space<vmem>>, vector<1x128xf32>
    %144 = vector.broadcast %143 : vector<1x128xf32> to vector<8x128xf32>
    %145 = arith.mulf %72, %144 : vector<8x128xf32>
    %cst_20 = arith.constant dense<0.000000e+00> : vector<8xf32>
    %146 = vector.multi_reduction <add>, %145, %cst_20 [1] : vector<8x128xf32> to vector<8xf32>
    %147 = vector.shape_cast %146 : vector<8xf32> to vector<8x1xf32>
    %c0_21 = arith.constant 0 : index
    %c0_22 = arith.constant 0 : index
    %148 = memref.load %arg8[%c0_21, %c0_22] : memref<1x1xf32, #tpu.memory_space<smem>>
    %149 = vector.broadcast %148 : f32 to vector<8x1xf32>
    %150 = arith.addf %147, %149 : vector<8x1xf32>
    %151 = arith.negf %150 : vector<8x1xf32>
    %152 = math.exp %151 : vector<8x1xf32>
    %cst_23 = arith.constant 1.000000e+00 : f32
    %153 = vector.broadcast %cst_23 : f32 to vector<8x1xf32>
    %154 = arith.addf %153, %152 : vector<8x1xf32>
    %155 = arith.divf %153, %154 : vector<8x1xf32>
    %156 = vector.broadcast %155 : vector<8x1xf32> to vector<8x128xf32>
    %157 = arith.mulf %156, %142 : vector<8x128xf32>
    %158 = arith.addf %72, %157 : vector<8x128xf32>
    %c0_24 = arith.constant 0 : index
    %c0_25 = arith.constant 0 : index
    %159 = vector.load %arg9[%c0_24, %c0_25] : memref<128x128xf32, #tpu.memory_space<vmem>>, vector<128x128xf32>
    %cst_26 = arith.constant dense<0.000000e+00> : vector<8x128xf32>
    %160 = tpu.matmul %158, %159, %cst_26 {dimension_numbers = #tpu.dot_dimension_numbers<[1], [0], [0], [1], [0, 0, 1, 1], [], []>} : vector<8x128xf32>, vector<128x128xf32>, vector<8x128xf32> -> vector<8x128xf32>
    %c0_27 = arith.constant 0 : index
    %c0_28 = arith.constant 0 : index
    %161 = vector.load %arg10[%c0_27, %c0_28] : memref<1x128xf32, #tpu.memory_space<vmem>>, vector<1x128xf32>
    %162 = vector.broadcast %161 : vector<1x128xf32> to vector<8x128xf32>
    %163 = arith.addf %160, %162 : vector<8x128xf32>
    %cst_29 = arith.constant 0.000000e+00 : f32
    %164 = vector.broadcast %cst_29 : f32 to vector<8x128xf32>
    %165 = arith.maximumf %163, %164 : vector<8x128xf32>
    %c0_30 = arith.constant 0 : index
    %c0_31 = arith.constant 0 : index
    %166 = vector.load %arg11[%c0_30, %c0_31] : memref<8x128xf32, #tpu.memory_space<vmem>>, vector<8x128xf32>
    tpu.vector_store %arg11[%c0_30, %c0_31], %165 {strides = array<i32>} : memref<8x128xf32, #tpu.memory_space<vmem>>, vector<8x128xf32>,
    return
  }
  func.func @transform_0(%arg0: i32) -> (i32, i32) {
    %c0_i32 = arith.constant 0 : i32
    %c0_i32_0 = arith.constant 0 : i32
    return %arg0, %c0_i32 : i32, i32
  }
  func.func @transform_1(%arg0: i32) -> (i32, i32) {
    %c0_i32 = arith.constant 0 : i32
    %c0_i32_0 = arith.constant 0 : i32
    %c0_i32_1 = arith.constant 0 : i32
    return %c0_i32, %c0_i32_0 : i32, i32
  }
  func.func @transform_2(%arg0: i32) -> (i32, i32) {
    %c0_i32 = arith.constant 0 : i32
    %c0_i32_0 = arith.constant 0 : i32
    %c0_i32_1 = arith.constant 0 : i32
    return %c0_i32, %c0_i32_0 : i32, i32
  }
  func.func @transform_3(%arg0: i32) -> (i32, i32) {
    %c0_i32 = arith.constant 0 : i32
    %c0_i32_0 = arith.constant 0 : i32
    %c0_i32_1 = arith.constant 0 : i32
    return %c0_i32, %c0_i32_0 : i32, i32
  }
  func.func @transform_4(%arg0: i32) -> (i32, i32) {
    %c0_i32 = arith.constant 0 : i32
    %c0_i32_0 = arith.constant 0 : i32
    %c0_i32_1 = arith.constant 0 : i32
    return %c0_i32, %c0_i32_0 : i32, i32
  }
  func.func @transform_5(%arg0: i32) -> (i32, i32) {
    %c0_i32 = arith.constant 0 : i32
    %c0_i32_0 = arith.constant 0 : i32
    %c0_i32_1 = arith.constant 0 : i32
    return %c0_i32, %c0_i32_0 : i32, i32
  }
  func.func @transform_6(%arg0: i32) -> (i32, i32) {
    %c0_i32 = arith.constant 0 : i32
    %c0_i32_0 = arith.constant 0 : i32
    %c0_i32_1 = arith.constant 0 : i32
    return %c0_i32, %c0_i32_0 : i32, i32
  }
  func.func @transform_7(%arg0: i32) -> (i32, i32) {
    %c0_i32 = arith.constant 0 : i32
    %c0_i32_0 = arith.constant 0 : i32
    %c0_i32_1 = arith.constant 0 : i32
    return %c0_i32, %c0_i32_0 : i32, i32
  }
  func.func @transform_8(%arg0: i32) -> (i32, i32) {
    %c0_i32 = arith.constant 0 : i32
    %c0_i32_0 = arith.constant 0 : i32
    %c0_i32_1 = arith.constant 0 : i32
    return %c0_i32, %c0_i32_0 : i32, i32
  }
  func.func @transform_9(%arg0: i32) -> (i32, i32) {
    %c0_i32 = arith.constant 0 : i32
    %c0_i32_0 = arith.constant 0 : i32
    %c0_i32_1 = arith.constant 0 : i32
    return %c0_i32, %c0_i32_0 : i32, i32
  }
  func.func @transform_10(%arg0: i32) -> (i32, i32) {
    %c0_i32 = arith.constant 0 : i32
    %c0_i32_0 = arith.constant 0 : i32
    return %arg0, %c0_i32 : i32, i32
  }
}

</mosaic_0001>

<llo_original>
// kernel: tpu_custom_call.1
$region0: #{tpu_custom_call.1}
  #allocation0 [shape = 'u32[]', space=smem, size = 0x4, offset = 0x4, fixed_abs, tag = 'smem constant byte address 0x4 - core index']
  #allocation1 [shape = 'u32[144,128]{1,0:T(1,128)}', space=vmem, size = 0x12000, scoped, tag = 'internal scratch']
  #allocation2 [shape = 'f32[1,1]{1,0:T(1,128)S(6)}', space=smem, size = 0x200, scoped, tag = 'scoped memory for tpu_custom_call.1']
  %s0 = inlined_call_operand.hbm [shape: s32[16,16], index: 0, kind: input, shape index: {}]
  %s1 = inlined_call_operand.vmem [shape: f32[1,128], index: 1, kind: input, shape index: {}]
  %s2 = inlined_call_operand.hbm [shape: f32[128,128], index: 2, kind: input, shape index: {}]
  %s3 = inlined_call_operand.hbm [shape: f32[128,128], index: 3, kind: input, shape index: {}]
  %s4 = inlined_call_operand.vmem [shape: f32[1,128], index: 4, kind: input, shape index: {}]
  %s5 = inlined_call_operand.vmem [shape: f32[1,128], index: 5, kind: input, shape index: {}]
  %s6 = inlined_call_operand.vmem [shape: f32[1,128], index: 6, kind: input, shape index: {}]
  %s7 = inlined_call_operand.<no memory space> [shape: f32[1,1], index: 7, kind: input, shape index: {}]
  %s8 = inlined_call_operand.hbm [shape: f32[128,128], index: 8, kind: input, shape index: {}]
  %s9 = inlined_call_operand.vmem [shape: f32[1,128], index: 9, kind: input, shape index: {}]
  %s10 = inlined_call_operand.hbm [shape: f32[16,128], index: 10, kind: output, shape index: {}]
  %s11 = sld [smem:[#allocation0]]
  $region89: #{tpu_custom_call.1} parent=0
    _
  %s13 = ssub.s32 1, %s11
  %s14 = scalar_select 0, %s13, %s11
  %15 = sst [smem:[#allocation2]] %s7
  $region1: #{tpu_custom_call.1} parent=0
    #allocation3 [shape = 'u8[8192]{0}', space=vmem, size = 0x2000, scoped, tag = 'input window, operand 0']
    #allocation4 [shape = 's32[2]{0}', space=sflag, size = 0x8, scoped, tag = 'scoped memory for tpu_custom_call.1']
    #allocation5 [shape = 's32[2]{0}', space=sflag, size = 0x8, scoped, tag = 'scoped memory for tpu_custom_call.1']
    #allocation6 [shape = 'u8[65536]{0}', space=vmem, size = 0x10000, scoped, tag = 'input window, operand 2, single buffered']
    #allocation7 [shape = 's32[1]{0}', space=sflag, size = 0x4, scoped, tag = 'scoped memory for tpu_custom_call.1']
    #allocation8 [shape = 'u8[65536]{0}', space=vmem, size = 0x10000, scoped, tag = 'input window, operand 3, single buffered']
    #allocation9 [shape = 'u8[65536]{0}', space=vmem, size = 0x10000, scoped, tag = 'input window, operand 8, single buffered']
    #allocation10 [shape = 's32[1]{0}', space=sflag, size = 0x4, scoped, tag = 'scoped memory for tpu_custom_call.1']
    #allocation11 [shape = 'u8[8192]{0}', space=vmem, size = 0x2000, scoped, tag = 'output window, operand 0']
    %16 = vsyncpa [#allocation4], 0
    %s17 = scalar_lea.sflag [#allocation4], 1
    %18 = vsyncpa %s17, 0
    %19 = vsyncpa [#allocation7], 0
    %20 = vsyncpa [#allocation10], 0
    %21 = vsyncpa [#allocation5], 0
    %s22 = scalar_lea.sflag [#allocation5], 1
    %23 = vsyncpa %s22, 0
    loop: start=0, step=1, limit=4
    $region2: #{tpu_custom_call.1} parent=1 // loop_pre_header
      _
    $region3: #{tpu_custom_call.1} parent=1 // loop_header
      %s25 = sphi 0, %s29
      %p26 = scmp.ge.s32.totalorder %s25, 4
      %s35 = sphi 0, %s37
      %s38 = sphi 0, %s35
      %s39 = sphi 0, %s38
      %s55 = sphi 0, %s39
      %s59 = sphi 0, %s59
      %s61 = sphi 0, %s59
      %s62 = sphi 0, %s61
      %s76 = sphi 0, %s62
      %s80 = sphi 0, %s80
      %s82 = sphi 0, %s80
      %s83 = sphi 0, %s82
      %s97 = sphi 0, %s83
      %s101 = sphi 0, %s101
      %s103 = sphi 0, %s101
      %s104 = sphi 0, %s103
      %s118 = sphi 0, %s104
      %s122 = sphi 0, %s122
      %s124 = sphi 0, %s122
      %s125 = sphi 0, %s124
      %s139 = sphi 0, %s125
      %s143 = sphi 0, %s143
      %s145 = sphi 0, %s143
      %s146 = sphi 0, %s145
      %s160 = sphi 0, %s146
      %s164 = sphi 0, %s164
      %s166 = sphi 0, %s164
      %s167 = sphi 0, %s166
      %s181 = sphi 0, %s167
      %s185 = sphi 0, %s185
      %s187 = sphi 0, %s185
      %s188 = sphi 0, %s187
      %s202 = sphi 0, %s188
      %s206 = sphi 0, %s206
      %s208 = sphi 0, %s206
      %s209 = sphi 0, %s208
      %s223 = sphi 0, %s209
      %s227 = sphi 0, %s227
      %s229 = sphi 0, %s227
      %s230 = sphi 0, %s229
      %s244 = sphi 0, %s230
      %s250 = sphi 0, %s252
      %s253 = sphi 0, %s250
      %s254 = sphi 0, %s253
      %s270 = sphi 0, %s254
    $region4: #{tpu_custom_call.1} parent=1 // loop_header_branch
      %28 = sbr.rel (%p26) target = $region8
    $region5: #{tpu_custom_call.1} parent=1 // loop_body
      %s30 = ssub.s32 %s25, 1
      %s31 = ssub.s32 %s25, 2
      %s32 = sadd.s32 %s25, 1
      %s33 = ssub.s32 %s25, %s32
      %p34 = scmp.eq.s32.totalorder %s33, 0
      %s36 = sadd.s32 %s35, 1
      %s37 = scalar_select %p34, %s35, %s36
      %p40 = pneg %p34
      %p41 = scmp.eq.s32.totalorder %s25, 1
      %p42 = por %p40, %p41
      %p43 = scmp.ne.s32.totalorder %s35, %s38
      %p44 = scmp.eq.s32.totalorder %s25, 0
      %p45 = por %p43, %p44
      %p46 = scmp.ne.s32.totalorder %s35, %s38
      %p47 = scmp.eq.s32.totalorder %s30, 1
      %p48 = por %p46, %p47
      %p49 = scmp.ne.s32.totalorder %s38, %s39
      %p50 = scmp.eq.s32.totalorder %s30, 0
      %p51 = por %p49, %p50
      %p52 = scmp.ne.s32.totalorder %s38, %s39
      %p53 = scmp.eq.s32.totalorder %s31, 1
      %p54 = por %p52, %p53
      %p56 = scmp.ne.s32.totalorder %s39, %s55
      %p57 = scmp.eq.s32.totalorder %s31, 0
      %p58 = por %p56, %p57
      %s60 = sadd.s32 %s59, 1
      %p63 = scmp.eq.s32.totalorder %s25, 1
      %p64 = scmp.ne.s32.totalorder %s59, %s61
      %p65 = scmp.eq.s32.totalorder %s25, 0
      %p66 = por %p64, %p65
      %p67 = scmp.ne.s32.totalorder %s59, %s61
      %p68 = scmp.eq.s32.totalorder %s30, 1
      %p69 = por %p67, %p68
      %p70 = scmp.ne.s32.totalorder %s61, %s62
      %p71 = scmp.eq.s32.totalorder %s30, 0
      %p72 = por %p70, %p71
      %p73 = scmp.ne.s32.totalorder %s61, %s62
      %p74 = scmp.eq.s32.totalorder %s31, 1
      %p75 = por %p73, %p74
      %p77 = scmp.ne.s32.totalorder %s62, %s76
      %p78 = scmp.eq.s32.totalorder %s31, 0
      %p79 = por %p77, %p78
      %s81 = sadd.s32 %s80, 1
      %p84 = scmp.eq.s32.totalorder %s25, 1
      %p85 = scmp.ne.s32.totalorder %s80, %s82
      %p86 = scmp.eq.s32.totalorder %s25, 0
      %p87 = por %p85, %p86
      %p88 = scmp.ne.s32.totalorder %s80, %s82
      %p89 = scmp.eq.s32.totalorder %s30, 1
      %p90 = por %p88, %p89
      %p91 = scmp.ne.s32.totalorder %s82, %s83
      %p92 = scmp.eq.s32.totalorder %s30, 0
      %p93 = por %p91, %p92
      %p94 = scmp.ne.s32.totalorder %s82, %s83
      %p95 = scmp.eq.s32.totalorder %s31, 1
      %p96 = por %p94, %p95
      %p98 = scmp.ne.s32.totalorder %s83, %s97
      %p99 = scmp.eq.s32.totalorder %s31, 0
      %p100 = por %p98, %p99
      %s102 = sadd.s32 %s101, 1
      %p105 = scmp.eq.s32.totalorder %s25, 1
      %p106 = scmp.ne.s32.totalorder %s101, %s103
      %p107 = scmp.eq.s32.totalorder %s25, 0
      %p108 = por %p106, %p107
      %p109 = scmp.ne.s32.totalorder %s101, %s103
      %p110 = scmp.eq.s32.totalorder %s30, 1
      %p111 = por %p109, %p110
      %p112 = scmp.ne.s32.totalorder %s103, %s104
      %p113 = scmp.eq.s32.totalorder %s30, 0
      %p114 = por %p112, %p113
      %p115 = scmp.ne.s32.totalorder %s103, %s104
      %p116 = scmp.eq.s32.totalorder %s31, 1
      %p117 = por %p115, %p116
      %p119 = scmp.ne.s32.totalorder %s104, %s118
      %p120 = scmp.eq.s32.totalorder %s31, 0
      %p121 = por %p119, %p120
      %s123 = sadd.s32 %s122, 1
      %p126 = scmp.eq.s32.totalorder %s25, 1
      %p127 = scmp.ne.s32.totalorder %s122, %s124
      %p128 = scmp.eq.s32.totalorder %s25, 0
      %p129 = por %p127, %p128
      %p130 = scmp.ne.s32.totalorder %s122, %s124
      %p131 = scmp.eq.s32.totalorder %s30, 1
      %p132 = por %p130, %p131
      %p133 = scmp.ne.s32.totalorder %s124, %s125
      %p134 = scmp.eq.s32.totalorder %s30, 0
      %p135 = por %p133, %p134
      %p136 = scmp.ne.s32.totalorder %s124, %s125
      %p137 = scmp.eq.s32.totalorder %s31, 1
      %p138 = por %p136, %p137
      %p140 = scmp.ne.s32.totalorder %s125, %s139
      %p141 = scmp.eq.s32.totalorder %s31, 0
      %p142 = por %p140, %p141
      %s144 = sadd.s32 %s143, 1
      %p147 = scmp.eq.s32.totalorder %s25, 1
      %p148 = scmp.ne.s32.totalorder %s143, %s145
      %p149 = scmp.eq.s32.totalorder %s25, 0
      %p150 = por %p148, %p149
      %p151 = scmp.ne.s32.totalorder %s143, %s145
      %p152 = scmp.eq.s32.totalorder %s30, 1
      %p153 = por %p151, %p152
      %p154 = scmp.ne.s32.totalorder %s145, %s146
      %p155 = scmp.eq.s32.totalorder %s30, 0
      %p156 = por %p154, %p155
      %p157 = scmp.ne.s32.totalorder %s145, %s146
      %p158 = scmp.eq.s32.totalorder %s31, 1
      %p159 = por %p157, %p158
      %p161 = scmp.ne.s32.totalorder %s146, %s160
      %p162 = scmp.eq.s32.totalorder %s31, 0
      %p163 = por %p161, %p162
      %s165 = sadd.s32 %s164, 1
      %p168 = scmp.eq.s32.totalorder %s25, 1
      %p169 = scmp.ne.s32.totalorder %s164, %s166
      %p170 = scmp.eq.s32.totalorder %s25, 0
      %p171 = por %p169, %p170
      %p172 = scmp.ne.s32.totalorder %s164, %s166
      %p173 = scmp.eq.s32.totalorder %s30, 1
      %p174 = por %p172, %p173
      %p175 = scmp.ne.s32.totalorder %s166, %s167
      %p176 = scmp.eq.s32.totalorder %s30, 0
      %p177 = por %p175, %p176
      %p178 = scmp.ne.s32.totalorder %s166, %s167
      %p179 = scmp.eq.s32.totalorder %s31, 1
      %p180 = por %p178, %p179
      %p182 = scmp.ne.s32.totalorder %s167, %s181
      %p183 = scmp.eq.s32.totalorder %s31, 0
      %p184 = por %p182, %p183
      %s186 = sadd.s32 %s185, 1
      %p189 = scmp.eq.s32.totalorder %s25, 1
      %p190 = scmp.ne.s32.totalorder %s185, %s187
      %p191 = scmp.eq.s32.totalorder %s25, 0
      %p192 = por %p190, %p191
      %p193 = scmp.ne.s32.totalorder %s185, %s187
      %p194 = scmp.eq.s32.totalorder %s30, 1
      %p195 = por %p193, %p194
      %p196 = scmp.ne.s32.totalorder %s187, %s188
      %p197 = scmp.eq.s32.totalorder %s30, 0
      %p198 = por %p196, %p197
      %p199 = scmp.ne.s32.totalorder %s187, %s188
      %p200 = scmp.eq.s32.totalorder %s31, 1
      %p201 = por %p199, %p200
      %p203 = scmp.ne.s32.totalorder %s188, %s202
      %p204 = scmp.eq.s32.totalorder %s31, 0
      %p205 = por %p203, %p204
      %s207 = sadd.s32 %s206, 1
      %p210 = scmp.eq.s32.totalorder %s25, 1
      %p211 = scmp.ne.s32.totalorder %s206, %s208
      %p212 = scmp.eq.s32.totalorder %s25, 0
      %p213 = por %p211, %p212
      %p214 = scmp.ne.s32.totalorder %s206, %s208
      %p215 = scmp.eq.s32.totalorder %s30, 1
      %p216 = por %p214, %p215
      %p217 = scmp.ne.s32.totalorder %s208, %s209
      %p218 = scmp.eq.s32.totalorder %s30, 0
      %p219 = por %p217, %p218
      %p220 = scmp.ne.s32.totalorder %s208, %s209
      %p221 = scmp.eq.s32.totalorder %s31, 1
      %p222 = por %p220, %p221
      %p224 = scmp.ne.s32.totalorder %s209, %s223
      %p225 = scmp.eq.s32.totalorder %s31, 0
      %p226 = por %p224, %p225
      %s228 = sadd.s32 %s227, 1
      %p231 = scmp.eq.s32.totalorder %s25, 1
      %p232 = scmp.ne.s32.totalorder %s227, %s229
      %p233 = scmp.eq.s32.totalorder %s25, 0
      %p234 = por %p232, %p233
      %p235 = scmp.ne.s32.totalorder %s227, %s229
      %p236 = scmp.eq.s32.totalorder %s30, 1
      %p237 = por %p235, %p236
      %p238 = scmp.ne.s32.totalorder %s229, %s230
      %p239 = scmp.eq.s32.totalorder %s30, 0
      %p240 = por %p238, %p239
      %p241 = scmp.ne.s32.totalorder %s229, %s230
      %p242 = scmp.eq.s32.totalorder %s31, 1
      %p243 = por %p241, %p242
      %p245 = scmp.ne.s32.totalorder %s230, %s244
      %p246 = scmp.eq.s32.totalorder %s31, 0
      %p247 = por %p245, %p246
      %s248 = ssub.s32 %s25, %s32
      %p249 = scmp.eq.s32.totalorder %s248, 0
      %s251 = sadd.s32 %s250, 1
      %s252 = scalar_select %p249, %s250, %s251
      %p255 = pneg %p249
      %p256 = scmp.eq.s32.totalorder %s25, 1
      %p257 = por %p255, %p256
      %p258 = scmp.ne.s32.totalorder %s250, %s253
      %p259 = scmp.eq.s32.totalorder %s25, 0
      %p260 = por %p258, %p259
      %p261 = scmp.ne.s32.totalorder %s250, %s253
      %p262 = scmp.eq.s32.totalorder %s30, 1
      %p263 = por %p261, %p262
      %p264 = scmp.ne.s32.totalorder %s253, %s254
      %p265 = scmp.eq.s32.totalorder %s30, 0
      %p266 = por %p264, %p265
      %p267 = scmp.ne.s32.totalorder %s253, %s254
      %p268 = scmp.eq.s32.totalorder %s31, 1
      %p269 = por %p267, %p268
      %p271 = scmp.ne.s32.totalorder %s254, %s270
      %p272 = scmp.eq.s32.totalorder %s31, 0
      %p273 = por %p271, %p272
      %p274 = scmp.le.s32.totalorder 1, %s25
      %p275 = scmp.lt.s32.totalorder %s25, 3
      %p276 = pnand %p274, %p275
      %p277 = pneg %p276
      // Predicated region
      $region9: #{tpu_custom_call.1} parent=5 // pred_check
        _
      $region10: #{tpu_custom_call.1} parent=5 // pred_check_branch
        %279 = sbr.rel (%p276) target = $region12
      $region11: #{tpu_custom_call.1} parent=5 // pred_region
        %s280 = ssub.s32 %s25, 1
        // Predicated region
        $region13: #{tpu_custom_call.1} parent=11 // pred_check
          %p281 = pneg %p72
        $region14: #{tpu_custom_call.1} parent=11 // pred_check_branch
          %283 = sbr.rel (%p281) target = $region16
        $region15: #{tpu_custom_call.1} parent=11 // pred_region
          _
        $region16: #{tpu_custom_call.1} parent=11 // pred_fallthru
          _
        // Predicated region
        $region17: #{tpu_custom_call.1} parent=11 // pred_check
          %p284 = pneg %p93
        $region18: #{tpu_custom_call.1} parent=11 // pred_check_branch
          %286 = sbr.rel (%p284) target = $region20
        $region19: #{tpu_custom_call.1} parent=11 // pred_region
          %s288 = ssub.s32 2048, 2048
          %289 = vsyncadd [#allocation7], %s288
          %s290 = sshll.u32 [#allocation6], 4
          %s291 = int_to_ptr.vmem [resolvable:$true] %s290
          %296 = dma.hbm_to_vmem [thread:$0]  %s2, 2048, %s291, [#allocation7], 128, 128, 8
        $region20: #{tpu_custom_call.1} parent=11 // pred_fallthru
          _
        // Predicated region
        $region21: #{tpu_custom_call.1} parent=11 // pred_check
          %p297 = pneg %p114
        $region22: #{tpu_custom_call.1} parent=11 // pred_check_branch
          %299 = sbr.rel (%p297) target = $region24
        $region23: #{tpu_custom_call.1} parent=11 // pred_region
          %s301 = ssub.s32 2048, 2048
          %302 = vsyncadd [#allocation7], %s301
          %s303 = sshll.u32 [#allocation8], 4
          %s304 = int_to_ptr.vmem [resolvable:$true] %s303
          %309 = dma.hbm_to_vmem [thread:$0]  %s3, 2048, %s304, [#allocation7], 128, 128, 8
        $region24: #{tpu_custom_call.1} parent=11 // pred_fallthru
          _
        // Predicated region
        $region25: #{tpu_custom_call.1} parent=11 // pred_check
          %p310 = pneg %p135
        $region26: #{tpu_custom_call.1} parent=11 // pred_check_branch
          %312 = sbr.rel (%p310) target = $region28
        $region27: #{tpu_custom_call.1} parent=11 // pred_region
          _
        $region28: #{tpu_custom_call.1} parent=11 // pred_fallthru
          _
        // Predicated region
        $region29: #{tpu_custom_call.1} parent=11 // pred_check
          %p313 = pneg %p156
        $region30: #{tpu_custom_call.1} parent=11 // pred_check_branch
          %315 = sbr.rel (%p313) target = $region32
        $region31: #{tpu_custom_call.1} parent=11 // pred_region
          _
        $region32: #{tpu_custom_call.1} parent=11 // pred_fallthru
          _
        // Predicated region
        $region33: #{tpu_custom_call.1} parent=11 // pred_check
          %p316 = pneg %p177
        $region34: #{tpu_custom_call.1} parent=11 // pred_check_branch
          %318 = sbr.rel (%p316) target = $region36
        $region35: #{tpu_custom_call.1} parent=11 // pred_region
          _
        $region36: #{tpu_custom_call.1} parent=11 // pred_fallthru
          _
        // Predicated region
        $region37: #{tpu_custom_call.1} parent=11 // pred_check
          %p319 = pneg %p198
        $region38: #{tpu_custom_call.1} parent=11 // pred_check_branch
          %321 = sbr.rel (%p319) target = $region40
        $region39: #{tpu_custom_call.1} parent=11 // pred_region
          _
        $region40: #{tpu_custom_call.1} parent=11 // pred_fallthru
          _
        // Predicated region
        $region41: #{tpu_custom_call.1} parent=11 // pred_check
          %p322 = pneg %p219
        $region42: #{tpu_custom_call.1} parent=11 // pred_check_branch
          %324 = sbr.rel (%p322) target = $region44
        $region43: #{tpu_custom_call.1} parent=11 // pred_region
          %s326 = ssub.s32 2048, 2048
          %327 = vsyncadd [#allocation10], %s326
          %s328 = sshll.u32 [#allocation9], 4
          %s329 = int_to_ptr.vmem [resolvable:$true] %s328
          %334 = dma.hbm_to_vmem [thread:$0]  %s8, 2048, %s329, [#allocation10], 128, 128, 8
        $region44: #{tpu_custom_call.1} parent=11 // pred_fallthru
          _
        // Predicated region
        $region45: #{tpu_custom_call.1} parent=11 // pred_check
          %p335 = pneg %p240
        $region46: #{tpu_custom_call.1} parent=11 // pred_check_branch
          %337 = sbr.rel (%p335) target = $region48
        $region47: #{tpu_custom_call.1} parent=11 // pred_region
          _
        $region48: #{tpu_custom_call.1} parent=11 // pred_fallthru
          _
      $region12: #{tpu_custom_call.1} parent=5 // pred_fallthru
        _
      %p338 = scmp.lt.s32.totalorder %s25, 2
      // Predicated region
      $region49: #{tpu_custom_call.1} parent=5 // pred_check
        %p339 = pneg %p338
      $region50: #{tpu_custom_call.1} parent=5 // pred_check_branch
        %341 = sbr.rel (%p339) target = $region52
      $region51: #{tpu_custom_call.1} parent=5 // pred_region
        // Predicated region
        $region53: #{tpu_custom_call.1} parent=51 // pred_check
          %p342 = pneg %p45
        $region54: #{tpu_custom_call.1} parent=51 // pred_check_branch
          %344 = sbr.rel (%p342) target = $region56
        $region55: #{tpu_custom_call.1} parent=51 // pred_region
          %s345 = sand.u32 %s35, 1
          %s346 = scalar_lea.sflag [#allocation4], %s345
          %s347 = sand.u32 %s35, 1
          %s348 = smul.addr %s347, 8
          %s349 = scalar_lea.vmem [#allocation3], %s348
          %s351 = ssub.s32 128, 128
          %352 = vsyncadd %s346, %s351
          %s353 = smul.addr %s25, 128
          %s354 = scalar_lea.hbm %s0, %s353
          %s356 = sshll.u32 %s349, 4
          %s357 = int_to_ptr.vmem [resolvable:$true] %s356
          %359 = dma.hbm_to_vmem [thread:$0]  %s354, 128, %s357, %s346
        $region56: #{tpu_custom_call.1} parent=51 // pred_fallthru
          _
      $region52: #{tpu_custom_call.1} parent=5 // pred_fallthru
        _
      %p360 = scmp.le.s32.totalorder 1, %s25
      %p361 = scmp.lt.s32.totalorder %s25, 3
      %p362 = pnand %p360, %p361
      %p363 = pneg %p362
      // Predicated region
      $region57: #{tpu_custom_call.1} parent=5 // pred_check
        _
      $region58: #{tpu_custom_call.1} parent=5 // pred_check_branch
        %365 = sbr.rel (%p362) target = $region60
      $region59: #{tpu_custom_call.1} parent=5 // pred_region
        %s366 = ssub.s32 %s25, 1
        %s367 = sand.u32 %s38, 1
        %s368 = scalar_lea.sflag [#allocation4], %s367
        %s369 = sand.u32 %s38, 1
        %s370 = smul.addr %s369, 8
        %s371 = scalar_lea.vmem [#allocation3], %s370
        // Predicated region
        $region61: #{tpu_custom_call.1} parent=59 // pred_check
          %p372 = pneg %p51
        $region62: #{tpu_custom_call.1} parent=59 // pred_check_branch
          %374 = sbr.rel (%p372) target = $region64
        $region63: #{tpu_custom_call.1} parent=59 // pred_region
          %375 = dma.done %s368, 128
        $region64: #{tpu_custom_call.1} parent=59 // pred_fallthru
          _
        // Predicated region
        $region65: #{tpu_custom_call.1} parent=59 // pred_check
          %p376 = pneg %p93
        $region66: #{tpu_custom_call.1} parent=59 // pred_check_branch
          %378 = sbr.rel (%p376) target = $region68
        $region67: #{tpu_custom_call.1} parent=59 // pred_region
          %379 = dma.done [#allocation7], 2048
        $region68: #{tpu_custom_call.1} parent=59 // pred_fallthru
          _
        // Predicated region
        $region69: #{tpu_custom_call.1} parent=59 // pred_check
          %p380 = pneg %p114
        $region70: #{tpu_custom_call.1} parent=59 // pred_check_branch
          %382 = sbr.rel (%p380) target = $region72
        $region71: #{tpu_custom_call.1} parent=59 // pred_region
          %383 = dma.done [#allocation7], 2048
        $region72: #{tpu_custom_call.1} parent=59 // pred_fallthru
          _
        // Predicated region
        $region73: #{tpu_custom_call.1} parent=59 // pred_check
          %p384 = pneg %p219
        $region74: #{tpu_custom_call.1} parent=59 // pred_check_branch
          %386 = sbr.rel (%p384) target = $region76
        $region75: #{tpu_custom_call.1} parent=59 // pred_region
          %387 = dma.done [#allocation10], 2048
        $region76: #{tpu_custom_call.1} parent=59 // pred_fallthru
          _
        %s388 = sand.u32 %s38, 1
        %s389 = scalar_lea.sflag [#allocation4], %s388
        %s390 = sand.u32 %s38, 1
        %s391 = smul.addr %s390, 8
        %s392 = scalar_lea.vmem [#allocation3], %s391
        %p393 = pneg %p51
        %p394 = pneg %p48
        %p395 = pneg %p72
        %p396 = pneg %p69
        %p397 = pneg %p93
        %p398 = pneg %p90
        %p399 = pneg %p114
        %p400 = pneg %p111
        %p401 = pneg %p135
        %p402 = pneg %p132
        %p403 = pneg %p156
        %p404 = pneg %p153
        %p405 = pneg %p177
        %p406 = pneg %p174
        %p407 = pneg %p198
        %p408 = pneg %p195
        %p409 = pneg %p219
        %p410 = pneg %p216
        %p411 = pneg %p240
        %p412 = pneg %p237
        %p413 = pneg %p266
        %p414 = pneg %p263
        %s415 = sand.u32 %s253, 1
        %s416 = scalar_lea.sflag [#allocation5], %s415
        %s417 = sand.u32 %s253, 1
        %s418 = smul.addr %s417, 8
        %s419 = scalar_lea.vmem [#allocation11], %s418
        %v420 = vld [vmem:[%s371] sm:$0xff]
        %v421 = vld [vmem:[%s1] sm:$0x1]
        %v422 = vlaneseq
        %v423 = vand.u32 %v422, 127
        %424 = vset.pattern.permute.xlu0 0
        %425 = vperm.xlu0 %424, %v420
        %v426 = vpop.permute.xlu0 %425
        %vm427 = vcmp.eq.s32.totalorder %v426, %v423
        %v428 = vsel %vm427, 1, 0
        %v429 = vcvt.s32.f32 %v428
        %430 = vset.pattern.permute.xlu0 1
        %431 = vperm.xlu0 %430, %v420
        %v432 = vpop.permute.xlu0 %431
        %vm433 = vcmp.eq.s32.totalorder %v432, %v423
        %v434 = vsel %vm433, 1, 0
        %v435 = vcvt.s32.f32 %v434
        %v436 = vadd.f32 %v429, %v435
        %437 = vset.pattern.permute.xlu0 2
        %438 = vperm.xlu0 %437, %v420
        %v439 = vpop.permute.xlu0 %438
        %vm440 = vcmp.eq.s32.totalorder %v439, %v423
        %v441 = vsel %vm440, 1, 0
        %v442 = vcvt.s32.f32 %v441
        %v443 = vadd.f32 %v436, %v442
        %444 = vset.pattern.permute.xlu0 3
        %445 = vperm.xlu0 %444, %v420
        %v446 = vpop.permute.xlu0 %445
        %vm447 = vcmp.eq.s32.totalorder %v446, %v423
        %v448 = vsel %vm447, 1, 0
        %v449 = vcvt.s32.f32 %v448
        %v450 = vadd.f32 %v443, %v449
        %451 = vset.pattern.permute.xlu0 4
        %452 = vperm.xlu0 %451, %v420
        %v453 = vpop.permute.xlu0 %452
        %vm454 = vcmp.eq.s32.totalorder %v453, %v423
        %v455 = vsel %vm454, 1, 0
        %v456 = vcvt.s32.f32 %v455
        %v457 = vadd.f32 %v450, %v456
        %458 = vset.pattern.permute.xlu0 5
        %459 = vperm.xlu0 %458, %v420
        %v460 = vpop.permute.xlu0 %459
        %vm461 = vcmp.eq.s32.totalorder %v460, %v423
        %v462 = vsel %vm461, 1, 0
        %v463 = vcvt.s32.f32 %v462
        %v464 = vadd.f32 %v457, %v463
        %465 = vset.pattern.permute.xlu0 6
        %466 = vperm.xlu0 %465, %v420
        %v467 = vpop.permute.xlu0 %466
        %vm468 = vcmp.eq.s32.totalorder %v467, %v423
        %v469 = vsel %vm468, 1, 0
        %v470 = vcvt.s32.f32 %v469
        %v471 = vadd.f32 %v464, %v470
        %472 = vset.pattern.permute.xlu0 7
        %473 = vperm.xlu0 %472, %v420
        %v474 = vpop.permute.xlu0 %473
        %vm475 = vcmp.eq.s32.totalorder %v474, %v423
        %v476 = vsel %vm475, 1, 0
        %v477 = vcvt.s32.f32 %v476
        %v478 = vadd.f32 %v471, %v477
        %v480 = vlaneseq
        %v481 = vshrl.u32 %v480, 7
        %v482 = vsub.s32 0, %v481
        %v483 = vrot.slane %v421, %v482
        %v485 = vmul.f32 %v478, %v483
        %486 = vadd.xlane.f32.xlu0 %v485
        %v487 = vpop.xlane.xlu0 %486
        %v488 = vld [vmem:[#allocation6] sm:$0xff]
        %v489 = vld [vmem:[#allocation6 + $0x8] sm:$0xff]
        %v490 = vld [vmem:[#allocation6 + $0x10] sm:$0xff]
        %v491 = vld [vmem:[#allocation6 + $0x18] sm:$0xff]
        %v492 = vld [vmem:[#allocation6 + $0x20] sm:$0xff]
        %v493 = vld [vmem:[#allocation6 + $0x28] sm:$0xff]
        %v494 = vld [vmem:[#allocation6 + $0x30] sm:$0xff]
        %v495 = vld [vmem:[#allocation6 + $0x38] sm:$0xff]
        %v496 = vld [vmem:[#allocation6 + $0x40] sm:$0xff]
        %v497 = vld [vmem:[#allocation6 + $0x48] sm:$0xff]
        %v498 = vld [vmem:[#allocation6 + $0x50] sm:$0xff]
        %v499 = vld [vmem:[#allocation6 + $0x58] sm:$0xff]
        %v500 = vld [vmem:[#allocation6 + $0x60] sm:$0xff]
        %v501 = vld [vmem:[#allocation6 + $0x68] sm:$0xff]
        %v502 = vld [vmem:[#allocation6 + $0x70] sm:$0xff]
        %v503 = vld [vmem:[#allocation6 + $0x78] sm:$0xff]
        %504 = vmatprep.subr.mxu0 0.0
        %505 = vmatpush1.msra.mxu0 %v488
        %506 = vmatprep.subr.mxu0 0.0
        %507 = vmatpush1.msra.mxu0 %v489
        %508 = vmatprep.subr.mxu0 0.0
        %509 = vmatpush1.msra.mxu0 %v490
        %510 = vmatprep.subr.mxu0 0.0
        %511 = vmatpush1.msra.mxu0 %v491
        %512 = vmatprep.subr.mxu0 0.0
        %513 = vmatpush1.msra.mxu0 %v492
        %514 = vmatprep.subr.mxu0 0.0
        %515 = vmatpush1.msra.mxu0 %v493
        %516 = vmatprep.subr.mxu0 0.0
        %517 = vmatpush1.msra.mxu0 %v494
        %518 = vmatprep.subr.mxu0 0.0
        %519 = vmatpush1.msra.mxu0 %v495
        %520 = vmatprep.subr.mxu0 0.0
        %521 = vmatpush1.msra.mxu0 %v496
        %522 = vmatprep.subr.mxu0 0.0
        %523 = vmatpush1.msra.mxu0 %v497
        %524 = vmatprep.subr.mxu0 0.0
        %525 = vmatpush1.msra.mxu0 %v498
        %526 = vmatprep.subr.mxu0 0.0
        %527 = vmatpush1.msra.mxu0 %v499
        %528 = vmatprep.subr.mxu0 0.0
        %529 = vmatpush1.msra.mxu0 %v500
        %530 = vmatprep.subr.mxu0 0.0
        %531 = vmatpush1.msra.mxu0 %v501
        %532 = vmatprep.subr.mxu0 0.0
        %533 = vmatpush1.msra.mxu0 %v502
        %534 = vmatprep.subr.mxu0 0.0
        %535 = vmatpush1.msra.mxu0 %v503
        %536 = vmatprep.subr.mxu0 0.0
        %537 = vmatpush1.msra.mxu0 0.0
        %538 = vmatprep.subr.mxu0 0.0
        %539 = vmatpush1.msra.mxu0 0.0
        %540 = vmatprep.subr.mxu0 0.0
        %541 = vmatpush1.msra.mxu0 0.0
        %542 = vmatprep.subr.mxu0 0.0
        %543 = vmatpush1.msra.mxu0 0.0
        %544 = vmatprep.subr.mxu0 0.0
        %545 = vmatpush1.msra.mxu0 0.0
        %546 = vmatprep.subr.mxu0 0.0
        %547 = vmatpush1.msra.mxu0 0.0
        %548 = vmatprep.subr.mxu0 0.0
        %549 = vmatpush1.msra.mxu0 0.0
        %550 = vmatprep.subr.mxu0 0.0
        %551 = vmatpush1.msra.mxu0 0.0
        %552 = vmatprep.subr.mxu0 0.0
        %553 = vmatpush1.msra.mxu0 0.0
        %554 = vmatprep.subr.mxu0 0.0
        %555 = vmatpush1.msra.mxu0 0.0
        %556 = vmatprep.subr.mxu0 0.0
        %557 = vmatpush1.msra.mxu0 0.0
        %558 = vmatprep.subr.mxu0 0.0
        %559 = vmatpush1.msra.mxu0 0.0
        %560 = vmatprep.subr.mxu0 0.0
        %561 = vmatpush1.msra.mxu0 0.0
        %562 = vmatprep.subr.mxu0 0.0
        %563 = vmatpush1.msra.mxu0 0.0
        %564 = vmatprep.subr.mxu0 0.0
        %565 = vmatpush1.msra.mxu0 0.0
        %566 = vmatprep.subr.mxu0 0.0
        %567 = vmatpush1.msra.mxu0 0.0
        %568 = vmatprep.mubr.f32.mxu0 0.0
        %569 = vmatmul.mubr.f32.gmra.mrb[0].mxu0 %v485
        %v570 = vpop.f32.mrb[0].mxu0
        %v571 = vadd.f32 0.0, %v570
        %v572 = vpop.f32.mrb[0].mxu0
        %573 = vdwg.mxu0
        %v574 = vrcp.pop %v487
        %v575 = vmul.f32 1.0, %v574
        %v576 = vmul.f32 %v571, %v575
        %v577 = vld [vmem:[%s4] sm:$0x1]
        %v579 = vlaneseq
        %v580 = vshrl.u32 %v579, 7
        %v581 = vsub.s32 0, %v580
        %v582 = vrot.slane %v577, %v581
        %v584 = vadd.f32 %v576, %v582
        %v585 = vmax.f32 %v584, 0.0
        %586 = vset.pattern.permute.xlu0 8
        %587 = vperm.xlu0 %586, %v420
        %v588 = vpop.permute.xlu0 %587
        %vm589 = vcmp.eq.s32.totalorder %v588, %v423
        %v590 = vsel %vm589, 1, 0
        %v591 = vcvt.s32.f32 %v590
        %592 = vset.pattern.permute.xlu0 9
        %593 = vperm.xlu0 %592, %v420
        %v594 = vpop.permute.xlu0 %593
        %vm595 = vcmp.eq.s32.totalorder %v594, %v423
        %v596 = vsel %vm595, 1, 0
        %v597 = vcvt.s32.f32 %v596
        %v598 = vadd.f32 %v591, %v597
        %599 = vset.pattern.permute.xlu0 10
        %600 = vperm.xlu0 %599, %v420
        %v601 = vpop.permute.xlu0 %600
        %vm602 = vcmp.eq.s32.totalorder %v601, %v423
        %v603 = vsel %vm602, 1, 0
        %v604 = vcvt.s32.f32 %v603
        %v605 = vadd.f32 %v598, %v604
        %606 = vset.pattern.permute.xlu0 11
        %607 = vperm.xlu0 %606, %v420
        %v608 = vpop.permute.xlu0 %607
        %vm609 = vcmp.eq.s32.totalorder %v608, %v423
        %v610 = vsel %vm609, 1, 0
        %v611 = vcvt.s32.f32 %v610
        %v612 = vadd.f32 %v605, %v611
        %613 = vset.pattern.permute.xlu0 12
        %614 = vperm.xlu0 %613, %v420
        %v615 = vpop.permute.xlu0 %614
        %vm616 = vcmp.eq.s32.totalorder %v615, %v423
        %v617 = vsel %vm616, 1, 0
        %v618 = vcvt.s32.f32 %v617
        %v619 = vadd.f32 %v612, %v618
        %620 = vset.pattern.permute.xlu0 13
        %621 = vperm.xlu0 %620, %v420
        %v622 = vpop.permute.xlu0 %621
        %vm623 = vcmp.eq.s32.totalorder %v622, %v423
        %v624 = vsel %vm623, 1, 0
        %v625 = vcvt.s32.f32 %v624
        %v626 = vadd.f32 %v619, %v625
        %627 = vset.pattern.permute.xlu0 14
        %628 = vperm.xlu0 %627, %v420
        %v629 = vpop.permute.xlu0 %628
        %vm630 = vcmp.eq.s32.totalorder %v629, %v423
        %v631 = vsel %vm630, 1, 0
        %v632 = vcvt.s32.f32 %v631
        %v633 = vadd.f32 %v626, %v632
        %634 = vset.pattern.permute.xlu0 15
        %635 = vperm.xlu0 %634, %v420
        %v636 = vpop.permute.xlu0 %635
        %vm637 = vcmp.eq.s32.totalorder %v636, %v423
        %v638 = vsel %vm637, 1, 0
        %v639 = vcvt.s32.f32 %v638
        %v640 = vadd.f32 %v633, %v639
        %v641 = vmul.f32 %v640, %v483
        %642 = vadd.xlane.f32.xlu0 %v641
        %v643 = vpop.xlane.xlu0 %642
        %v644 = vld [vmem:[#allocation8] sm:$0xff]
        %v645 = vld [vmem:[#allocation8 + $0x8] sm:$0xff]
        %v646 = vld [vmem:[#allocation8 + $0x10] sm:$0xff]
        %v647 = vld [vmem:[#allocation8 + $0x18] sm:$0xff]
        %v648 = vld [vmem:[#allocation8 + $0x20] sm:$0xff]
        %v649 = vld [vmem:[#allocation8 + $0x28] sm:$0xff]
        %v650 = vld [vmem:[#allocation8 + $0x30] sm:$0xff]
        %v651 = vld [vmem:[#allocation8 + $0x38] sm:$0xff]
        %v652 = vld [vmem:[#allocation8 + $0x40] sm:$0xff]
        %v653 = vld [vmem:[#allocation8 + $0x48] sm:$0xff]
        %v654 = vld [vmem:[#allocation8 + $0x50] sm:$0xff]
        %v655 = vld [vmem:[#allocation8 + $0x58] sm:$0xff]
        %v656 = vld [vmem:[#allocation8 + $0x60] sm:$0xff]
        %v657 = vld [vmem:[#allocation8 + $0x68] sm:$0xff]
        %v658 = vld [vmem:[#allocation8 + $0x70] sm:$0xff]
        %v659 = vld [vmem:[#allocation8 + $0x78] sm:$0xff]
        %660 = vmatprep.subr.mxu0 0.0
        %661 = vmatpush1.msra.mxu0 %v644
        %662 = vmatprep.subr.mxu0 0.0
        %663 = vmatpush1.msra.mxu0 %v645
        %664 = vmatprep.subr.mxu0 0.0
        %665 = vmatpush1.msra.mxu0 %v646
        %666 = vmatprep.subr.mxu0 0.0
        %667 = vmatpush1.msra.mxu0 %v647
        %668 = vmatprep.subr.mxu0 0.0
        %669 = vmatpush1.msra.mxu0 %v648
        %670 = vmatprep.subr.mxu0 0.0
        %671 = vmatpush1.msra.mxu0 %v649
        %672 = vmatprep.subr.mxu0 0.0
        %673 = vmatpush1.msra.mxu0 %v650
        %674 = vmatprep.subr.mxu0 0.0
        %675 = vmatpush1.msra.mxu0 %v651
        %676 = vmatprep.subr.mxu0 0.0
        %677 = vmatpush1.msra.mxu0 %v652
        %678 = vmatprep.subr.mxu0 0.0
        %679 = vmatpush1.msra.mxu0 %v653
        %680 = vmatprep.subr.mxu0 0.0
        %681 = vmatpush1.msra.mxu0 %v654
        %682 = vmatprep.subr.mxu0 0.0
        %683 = vmatpush1.msra.mxu0 %v655
        %684 = vmatprep.subr.mxu0 0.0
        %685 = vmatpush1.msra.mxu0 %v656
        %686 = vmatprep.subr.mxu0 0.0
        %687 = vmatpush1.msra.mxu0 %v657
        %688 = vmatprep.subr.mxu0 0.0
        %689 = vmatpush1.msra.mxu0 %v658
        %690 = vmatprep.subr.mxu0 0.0
        %691 = vmatpush1.msra.mxu0 %v659
        %692 = vmatprep.subr.mxu0 0.0
        %693 = vmatpush1.msra.mxu0 0.0
        %694 = vmatprep.subr.mxu0 0.0
        %695 = vmatpush1.msra.mxu0 0.0
        %696 = vmatprep.subr.mxu0 0.0
        %697 = vmatpush1.msra.mxu0 0.0
        %698 = vmatprep.subr.mxu0 0.0
        %699 = vmatpush1.msra.mxu0 0.0
        %700 = vmatprep.subr.mxu0 0.0
        %701 = vmatpush1.msra.mxu0 0.0
        %702 = vmatprep.subr.mxu0 0.0
        %703 = vmatpush1.msra.mxu0 0.0
        %704 = vmatprep.subr.mxu0 0.0
        %705 = vmatpush1.msra.mxu0 0.0
        %706 = vmatprep.subr.mxu0 0.0
        %707 = vmatpush1.msra.mxu0 0.0
        %708 = vmatprep.subr.mxu0 0.0
        %709 = vmatpush1.msra.mxu0 0.0
        %710 = vmatprep.subr.mxu0 0.0
        %711 = vmatpush1.msra.mxu0 0.0
        %712 = vmatprep.subr.mxu0 0.0
        %713 = vmatpush1.msra.mxu0 0.0
        %714 = vmatprep.subr.mxu0 0.0
        %715 = vmatpush1.msra.mxu0 0.0
        %716 = vmatprep.subr.mxu0 0.0
        %717 = vmatpush1.msra.mxu0 0.0
        %718 = vmatprep.subr.mxu0 0.0
        %719 = vmatpush1.msra.mxu0 0.0
        %720 = vmatprep.subr.mxu0 0.0
        %721 = vmatpush1.msra.mxu0 0.0
        %722 = vmatprep.subr.mxu0 0.0
        %723 = vmatpush1.msra.mxu0 0.0
        %724 = vmatprep.mubr.f32.mxu0 0.0
        %725 = vmatmul.mubr.f32.gmra.mrb[0].mxu0 %v641
        %v726 = vpop.f32.mrb[0].mxu0
        %v727 = vadd.f32 0.0, %v726
        %v728 = vpop.f32.mrb[0].mxu0
        %729 = vdwg.mxu0
        %v730 = vrcp.pop %v643
        %v731 = vmul.f32 1.0, %v730
        %v732 = vmul.f32 %v727, %v731
        %v733 = vld [vmem:[%s5] sm:$0x1]
        %v735 = vlaneseq
        %v736 = vshrl.u32 %v735, 7
        %v737 = vsub.s32 0, %v736
        %v738 = vrot.slane %v733, %v737
        %v740 = vadd.f32 %v732, %v738
        %v741 = vmax.f32 %v740, 0.0
        %v742 = vld [vmem:[%s6] sm:$0x1]
        %v744 = vlaneseq
        %v745 = vshrl.u32 %v744, 7
        %v746 = vsub.s32 0, %v745
        %v747 = vrot.slane %v742, %v746
        %v749 = vmul.f32 %v585, %v747
        %750 = vadd.xlane.f32.xlu0 %v749
        %v751 = vpop.xlane.xlu0 %750
        %s752 = sld [smem:[#allocation2]]
        %v753 = vstv %s752
        %v754 = vadd.f32 %v751, %v753
        %v755 = vxor.u32 %v754, 2147483648
        %v756 = vmul.f32 %v755, 1.442695
        %v757 = vpow.pop %v756
        %v758 = vadd.f32 %v757, 1.0
        %v759 = vrcp.pop %v758
        %v760 = vmul.f32 1.0, %v759
        %v761 = vmul.f32 %v760, %v741
        %v762 = vadd.f32 %v585, %v761
        %v763 = vld [vmem:[#allocation9] sm:$0xff]
        %v764 = vld [vmem:[#allocation9 + $0x8] sm:$0xff]
        %v765 = vld [vmem:[#allocation9 + $0x10] sm:$0xff]
        %v766 = vld [vmem:[#allocation9 + $0x18] sm:$0xff]
        %v767 = vld [vmem:[#allocation9 + $0x20] sm:$0xff]
        %v768 = vld [vmem:[#allocation9 + $0x28] sm:$0xff]
        %v769 = vld [vmem:[#allocation9 + $0x30] sm:$0xff]
        %v770 = vld [vmem:[#allocation9 + $0x38] sm:$0xff]
        %v771 = vld [vmem:[#allocation9 + $0x40] sm:$0xff]
        %v772 = vld [vmem:[#allocation9 + $0x48] sm:$0xff]
        %v773 = vld [vmem:[#allocation9 + $0x50] sm:$0xff]
        %v774 = vld [vmem:[#allocation9 + $0x58] sm:$0xff]
        %v775 = vld [vmem:[#allocation9 + $0x60] sm:$0xff]
        %v776 = vld [vmem:[#allocation9 + $0x68] sm:$0xff]
        %v777 = vld [vmem:[#allocation9 + $0x70] sm:$0xff]
        %v778 = vld [vmem:[#allocation9 + $0x78] sm:$0xff]
        %v779 = vld [vmem:[%s9] sm:$0x1]
        %v781 = vlaneseq
        %v782 = vshrl.u32 %v781, 7
        %v783 = vsub.s32 0, %v782
        %v784 = vrot.slane %v779, %v783
        %786 = vmatprep.subr.mxu0 0.0
        %787 = vmatpush1.msra.mxu0 %v763
        %788 = vmatprep.subr.mxu0 0.0
        %789 = vmatpush1.msra.mxu0 %v764
        %790 = vmatprep.subr.mxu0 0.0
        %791 = vmatpush1.msra.mxu0 %v765
        %792 = vmatprep.subr.mxu0 0.0
        %793 = vmatpush1.msra.mxu0 %v766
        %794 = vmatprep.subr.mxu0 0.0
        %795 = vmatpush1.msra.mxu0 %v767
        %796 = vmatprep.subr.mxu0 0.0
        %797 = vmatpush1.msra.mxu0 %v768
        %798 = vmatprep.subr.mxu0 0.0
        %799 = vmatpush1.msra.mxu0 %v769
        %800 = vmatprep.subr.mxu0 0.0
        %801 = vmatpush1.msra.mxu0 %v770
        %802 = vmatprep.subr.mxu0 0.0
        %803 = vmatpush1.msra.mxu0 %v771
        %804 = vmatprep.subr.mxu0 0.0
        %805 = vmatpush1.msra.mxu0 %v772
        %806 = vmatprep.subr.mxu0 0.0
        %807 = vmatpush1.msra.mxu0 %v773
        %808 = vmatprep.subr.mxu0 0.0
        %809 = vmatpush1.msra.mxu0 %v774
        %810 = vmatprep.subr.mxu0 0.0
        %811 = vmatpush1.msra.mxu0 %v775
        %812 = vmatprep.subr.mxu0 0.0
        %813 = vmatpush1.msra.mxu0 %v776
        %814 = vmatprep.subr.mxu0 0.0
        %815 = vmatpush1.msra.mxu0 %v777
        %816 = vmatprep.subr.mxu0 0.0
        %817 = vmatpush1.msra.mxu0 %v778
        %818 = vmatprep.subr.mxu0 0.0
        %819 = vmatpush1.msra.mxu0 0.0
        %820 = vmatprep.subr.mxu0 0.0
        %821 = vmatpush1.msra.mxu0 0.0
        %822 = vmatprep.subr.mxu0 0.0
        %823 = vmatpush1.msra.mxu0 0.0
        %824 = vmatprep.subr.mxu0 0.0
        %825 = vmatpush1.msra.mxu0 0.0
        %826 = vmatprep.subr.mxu0 0.0
        %827 = vmatpush1.msra.mxu0 0.0
        %828 = vmatprep.subr.mxu0 0.0
        %829 = vmatpush1.msra.mxu0 0.0
        %830 = vmatprep.subr.mxu0 0.0
        %831 = vmatpush1.msra.mxu0 0.0
        %832 = vmatprep.subr.mxu0 0.0
        %833 = vmatpush1.msra.mxu0 0.0
        %834 = vmatprep.subr.mxu0 0.0
        %835 = vmatpush1.msra.mxu0 0.0
        %836 = vmatprep.subr.mxu0 0.0
        %837 = vmatpush1.msra.mxu0 0.0
        %838 = vmatprep.subr.mxu0 0.0
        %839 = vmatpush1.msra.mxu0 0.0
        %840 = vmatprep.subr.mxu0 0.0
        %841 = vmatpush1.msra.mxu0 0.0
        %842 = vmatprep.subr.mxu0 0.0
        %843 = vmatpush1.msra.mxu0 0.0
        %844 = vmatprep.subr.mxu0 0.0
        %845 = vmatpush1.msra.mxu0 0.0
        %846 = vmatprep.subr.mxu0 0.0
        %847 = vmatpush1.msra.mxu0 0.0
        %848 = vmatprep.subr.mxu0 0.0
        %849 = vmatpush1.msra.mxu0 0.0
        %850 = vmatprep.mubr.f32.mxu0 0.0
        %851 = vmatmul.mubr.f32.gmra.mrb[0].mxu0 %v762
        %v852 = vpop.f32.mrb[0].mxu0
        %v853 = vadd.f32 %v784, %v852
        %v854 = vpop.f32.mrb[0].mxu0
        %855 = vdwg.mxu0
        %v856 = vmax.f32 %v853, 0.0
        %857 = vst [vmem:[%s419] sm:$0xff] %v856
        %s858 = sand.u32 %s253, 1
        %s859 = scalar_lea.sflag [#allocation5], %s858
        %s860 = sand.u32 %s253, 1
        %s861 = smul.addr %s860, 8
        %s862 = scalar_lea.vmem [#allocation11], %s861
        // Predicated region
        $region77: #{tpu_custom_call.1} parent=59 // pred_check
          %p863 = pneg %p263
        $region78: #{tpu_custom_call.1} parent=59 // pred_check_branch
          %865 = sbr.rel (%p863) target = $region80
        $region79: #{tpu_custom_call.1} parent=59 // pred_region
          %s867 = ssub.s32 128, 128
          %868 = vsyncadd %s859, %s867
          %s869 = smul.addr %s30, 128
          %s870 = scalar_lea.hbm %s10, %s869
          %s872 = sshll.u32 %s862, 4
          %s873 = int_to_ptr.vmem [resolvable:$true] %s872
          %875 = dma.vmem_to_hbm [thread:$0]  %s873, 128, %s870, %s859
        $region80: #{tpu_custom_call.1} parent=59 // pred_fallthru
          _
      $region60: #{tpu_custom_call.1} parent=5 // pred_fallthru
        _
      %p876 = scmp.le.s32.totalorder 2, %s25
      // Predicated region
      $region81: #{tpu_custom_call.1} parent=5 // pred_check
        %p877 = pneg %p876
      $region82: #{tpu_custom_call.1} parent=5 // pred_check_branch
        %879 = sbr.rel (%p877) target = $region84
      $region83: #{tpu_custom_call.1} parent=5 // pred_region
        %s880 = ssub.s32 %s25, 2
        // Predicated region
        $region85: #{tpu_custom_call.1} parent=83 // pred_check
          %p881 = pneg %p269
        $region86: #{tpu_custom_call.1} parent=83 // pred_check_branch
          %883 = sbr.rel (%p881) target = $region88
        $region87: #{tpu_custom_call.1} parent=83 // pred_region
          %s884 = sand.u32 %s254, 1
          %s885 = scalar_lea.sflag [#allocation5], %s884
          %s886 = sand.u32 %s254, 1
          %s887 = smul.addr %s886, 8
          %s888 = scalar_lea.vmem [#allocation11], %s887
          %889 = dma.done %s885, 128
        $region88: #{tpu_custom_call.1} parent=83 // pred_fallthru
          _
      $region84: #{tpu_custom_call.1} parent=5 // pred_fallthru
        _
    $region6: #{tpu_custom_call.1} parent=1 // loop_footer
      %s29 = sadd.s32 1, %s25
    $region7: #{tpu_custom_call.1} parent=1 // loop_footer_branch
      %24 = sbr.rel target = $region3
    $region8: #{tpu_custom_call.1} parent=1 // loop_exit
      _
    %890 = vsyncpa [#allocation4], 1
    %s891 = scalar_lea.sflag [#allocation4], 1
    %892 = vsyncpa %s891, 1
    %893 = vsyncpa [#allocation7], 1
    %894 = vsyncpa [#allocation10], 1
    %895 = vsyncpa [#allocation5], 1
    %s896 = scalar_lea.sflag [#allocation5], 1
    %897 = vsyncpa %s896, 1

</llo_original>
